<compile_context>
chip_gen: v7x
topology: tpu7x:2x2x1
jax: 0.10.0
libtpu: 0.0.40
codegen_flags: <defaults>
</compile_context>

<pallas_src>
import math
from typing import NamedTuple

import jax
import jax.numpy as jnp
from jax.experimental import pallas as pl
from jax.experimental.pallas import tpu as pltpu


def _round_up(a, b):
    return ((a + b - 1) // b) * b


def _pick_tile(dim, max_tile, align):
    """Largest aligned tile <= max_tile that tiles round_up(dim, align) with minimal padding."""
    dim_a = _round_up(dim, align)
    if dim_a <= max_tile:
        return dim_a
    n_tiles = -(-dim_a // max_tile)
    return _round_up(-(-dim_a // n_tiles), align)


# --------------------------- kernels ---------------------------

def _noisy_linear_kernel_multi_k(x_ref, mu_w_ref, sig_w_ref, eps_in_ref,
                                 eps_out_ref, bias_ref, o_ref, acc_ref):
    """K-reduction variant: grid = (M, N, K), f32 VMEM accumulator."""
    k = pl.program_id(2)

    @pl.when(k == 0)
    def _():
        acc_ref[...] = jnp.zeros_like(acc_ref)

    x = x_ref[...]                                                    # (tm, tk)
    y_mu = jnp.dot(x, mu_w_ref[...],
                   preferred_element_type=jnp.float32)                # (tm, tn)
    y_sig = jnp.dot(x * eps_in_ref[...], sig_w_ref[...],
                    preferred_element_type=jnp.float32)               # (tm, tn)
    acc_ref[...] += y_mu + eps_out_ref[...] * y_sig

    @pl.when(k == pl.num_programs(2) - 1)
    def _():
        o_ref[...] = (acc_ref[...] + bias_ref[...]).astype(o_ref.dtype)


def _noisy_linear_kernel_single_k(x_ref, mu_w_ref, sig_w_ref, eps_in_ref,
                                  eps_out_ref, bias_ref, o_ref):
    """Full-K-in-VMEM variant: grid = (M, N); no k loop, no accumulator scratch."""
    x = x_ref[...]
    y_mu = jnp.dot(x, mu_w_ref[...], preferred_element_type=jnp.float32)
    y_sig = jnp.dot(x * eps_in_ref[...], sig_w_ref[...],
                    preferred_element_type=jnp.float32)
    o_ref[...] = (y_mu + eps_out_ref[...] * y_sig + bias_ref[...]).astype(o_ref.dtype)


# --------------------------- params / packing ---------------------------

class NoisyLinearPacked(NamedTuple):
    mu_wT: jax.Array      # (Kp, Np) transposed + zero-padded once (off the hot path)
    sigma_wT: jax.Array   # (Kp, Np)
    mu_b: jax.Array       # (N,)
    sigma_b: jax.Array    # (N,)
    eps_in: jax.Array     # (K,)  factorized noise
    eps_out: jax.Array    # (N,)  factorized noise (== epsilon_bias)
    in_dim: int
    out_dim: int
    tn: int
    tk: int


def pack_noisy_linear(mu_w, sigma_w, mu_b, sigma_b, eps_in, eps_out,
                      *, max_tn=512, max_tk=2048, weight_dtype=jnp.float32):
    """One-time weight layout: transpose to (K, N) and zero-pad to tile multiples.

    Do this at init / after each weight update -- NOT per forward call.
    weight_dtype=jnp.bfloat16 halves weight HBM traffic (f32 accumulation is kept),
    at a small precision cost.
    """
    N, K = mu_w.shape
    tn = _pick_tile(N, max_tn, 128)
    tk = _pick_tile(K, max_tk, 128)
    Np, Kp = _round_up(N, tn), _round_up(K, tk)
    mu_wT = jnp.pad(mu_w.T.astype(weight_dtype), ((0, Kp - K), (0, Np - N)))
    sigma_wT = jnp.pad(sigma_w.T.astype(weight_dtype), ((0, Kp - K), (0, Np - N)))
    return NoisyLinearPacked(mu_wT, sigma_wT, mu_b, sigma_b,
                             eps_in, eps_out, K, N, tn, tk)


# --------------------------- forward ---------------------------

def noisy_linear(x, p: NoisyLinearPacked, *, max_tm=512):
    """NoisyLinear forward: x (B, in_dim) -> (B, out_dim)."""
    B, K = x.shape
    assert K == p.in_dim, "input feature dim mismatch"
    N = p.out_dim
    Kp, Np = p.mu_wT.shape
    tn, tk = p.tn, p.tk

    tm = _pick_tile(B, max_tm, 8)
    Bp = _round_up(B, tm)

    # Cheap per-call padding only: x, eps rows, fused bias row.
    xp = jnp.pad(x, ((0, Bp - B), (0, Kp - K))).astype(p.mu_wT.dtype)
    eps_in_p = jnp.pad(p.eps_in.astype(jnp.float32).reshape(1, K),
                       ((0, 0), (0, Kp - K)))
    eps_out_p = jnp.pad(p.eps_out.astype(jnp.float32).reshape(1, N),
                        ((0, 0), (0, Np - N)))
    bias = (p.mu_b + p.sigma_b * p.eps_out).astype(jnp.float32)   # eps_bias == eps_out
    bias_p = jnp.pad(bias.reshape(1, N), ((0, 0), (0, Np - N)))

    gi, gj, gk = Bp // tm, Np // tn, Kp // tk

    # v7x: make sure at least one "parallel" grid axis has >= 2 blocks so the second
    # TensorCore gets work (no-op on v5e/v6e; skipped for tiny layers where Np < 256).
    if gi == 1 and gj == 1 and Np % 256 == 0:
        tn = Np // 2
        gj = 2

    # VMEM footprint (double-buffered inputs/outputs + f32 accumulator). Default tile
    # caps keep this <~40 MiB -> safe on v7x's 64 MiB VMEM; limit capped for v5e/v6e.
    wsz = jnp.dtype(p.mu_wT.dtype).itemsize
    vmem_bytes = (2 * tm * tk * wsz          # x
                  + 4 * tk * tn * wsz        # mu_w + sigma_w
                  + 2 * tm * tn * 4          # out
                  + tm * tn * 4              # accumulator
                  + 2 * (tk + 2 * tn) * 4)   # eps_in / eps_out / bias rows
    vmem_limit = int(min(vmem_bytes + (8 << 20), 100 << 20))

    if gk == 1:
        grid = (gi, gj)
        in_specs = [
            pl.BlockSpec((tm, tk), lambda i, j: (i, 0)),   # x
            pl.BlockSpec((tk, tn), lambda i, j: (0, j)),   # mu_w^T
            pl.BlockSpec((tk, tn), lambda i, j: (0, j)),   # sigma_w^T
            pl.BlockSpec((1, tk), lambda i, j: (0, 0)),    # eps_in
            pl.BlockSpec((1, tn), lambda i, j: (0, j)),    # eps_out
            pl.BlockSpec((1, tn), lambda i, j: (0, j)),    # fused bias
        ]
        out_spec = pl.BlockSpec((tm, tn), lambda i, j: (i, j))
        kernel = _noisy_linear_kernel_single_k
        scratch = []
        semantics = ("parallel", "parallel")
    else:
        grid = (gi, gj, gk)
        in_specs = [
            pl.BlockSpec((tm, tk), lambda i, j, k: (i, k)),   # x
            pl.BlockSpec((tk, tn), lambda i, j, k: (k, j)),   # mu_w^T
            pl.BlockSpec((tk, tn), lambda i, j, k: (k, j)),   # sigma_w^T
            pl.BlockSpec((1, tk), lambda i, j, k: (0, k)),    # eps_in
            pl.BlockSpec((1, tn), lambda i, j, k: (0, j)),    # eps_out
            pl.BlockSpec((1, tn), lambda i, j, k: (0, j)),    # fused bias
        ]
        out_spec = pl.BlockSpec((tm, tn), lambda i, j, k: (i, j))
        kernel = _noisy_linear_kernel_multi_k
        scratch = [pltpu.VMEM((tm, tn), jnp.float32)]
        semantics = ("parallel", "parallel", "arbitrary")

    out_p = pl.pallas_call(
        kernel,
        out_shape=jax.ShapeDtypeStruct((Bp, Np), x.dtype),
        grid_spec=pltpu.PrefetchScalarGridSpec(
            num_scalar_prefetch=0,
            grid=grid,
            in_specs=in_specs,
            out_specs=out_spec,
            scratch_shapes=scratch,
        ),
        compiler_params=pltpu.CompilerParams(
            dimension_semantics=semantics,
            vmem_limit_bytes=vmem_limit,
        ),
    )(xp, p.mu_wT, p.sigma_wT, eps_in_p, eps_out_p, bias_p)

    return out_p[:B, :N]


# --------------------------- init / noise (plain JAX glue) ---------------------------

def _scale_noise(key, size):
    # Matches torch: x.sign() * sqrt(|x|), x ~ N(0, 1).
    x = jax.random.normal(key, (size,), dtype=jnp.float32)
    return jnp.sign(x) * jnp.sqrt(jnp.abs(x))


def init_noisy_linear_params(key, input_dim, output_dim, sigma_zero=0.5):
    k_mu_w, k_mu_b, k_eps_in, k_eps_out = jax.random.split(key, 4)
    mu_std = 1.0 / math.sqrt(input_dim)
    mu_weight = mu_std * jax.random.normal(k_mu_w, (output_dim, input_dim),
                                           dtype=jnp.float32)
    mu_bias = mu_std * jax.random.normal(k_mu_b, (output_dim,), dtype=jnp.float32)
    init_sigma = sigma_zero / math.sqrt(input_dim)
    sigma_weight = jnp.full((output_dim, input_dim), init_sigma, dtype=jnp.float32)
    sigma_bias = jnp.full((output_dim,), init_sigma, dtype=jnp.float32)
    # sample_noise(): factorized noise kept factorized for the kernel
    # (epsilon_weight = outer(eps_out, eps_in), epsilon_bias = eps_out).
    eps_in = _scale_noise(k_eps_in, input_dim)
    eps_out = _scale_noise(k_eps_out, output_dim)
    return mu_weight, sigma_weight, mu_bias, sigma_bias, eps_in, eps_out


if __name__ == "__main__":
    key = jax.random.PRNGKey(0)
    k_params, k_x = jax.random.split(key)

    batch, input_dim, output_dim = 8, 32, 64
    mu_w, sigma_w, mu_b, sigma_b, eps_in, eps_out = init_noisy_linear_params(
        k_params, input_dim, output_dim, sigma_zero=0.5)

    # One-time weight packing (off the per-call hot path).
    packed = pack_noisy_linear(mu_w, sigma_w, mu_b, sigma_b, eps_in, eps_out)

    x = jax.random.normal(k_x, (batch, input_dim), dtype=jnp.float32)

    out = jax.block_until_ready(noisy_linear(x, packed))

    # Pure-JAX reference: materialize eps_w = outer(eps_out, eps_in) exactly like the
    # PyTorch module, then F.linear(x, mu + sigma*eps_w, mu_b + sigma_b*eps_b).
    eps_w = jnp.outer(eps_out, eps_in)
    w = mu_w + sigma_w * eps_w
    b = mu_b + sigma_b * eps_out
    ref = x @ w.T + b

    assert out.shape == (batch, output_dim)
    assert jnp.allclose(out, ref, atol=1e-4, rtol=1e-4)

    print("KERNEL_OK")
</pallas_src>

<mosaic_0001>
module attributes {stable_mosaic.version = 11 : i64} {
  func.func @_noisy_linear_kernel_single_k(%arg0: i32, %arg1: i32, %arg2: memref<8x128xf32, #tpu.memory_space<vmem>>, %arg3: memref<128x128xf32, #tpu.memory_space<vmem>>, %arg4: memref<128x128xf32, #tpu.memory_space<vmem>>, %arg5: memref<1x128xf32, #tpu.memory_space<vmem>>, %arg6: memref<1x128xf32, #tpu.memory_space<vmem>>, %arg7: memref<1x128xf32, #tpu.memory_space<vmem>>, %arg8: memref<8x128xf32, #tpu.memory_space<vmem>>) attributes {dimension_semantics = [#tpu.dimension_semantics<parallel>, #tpu.dimension_semantics<parallel>], iteration_bounds = array<i64: 1, 1>, scalar_prefetch = 0 : i64, scratch_operands = 0 : i64, tpu.core_type = #tpu.core_type<tc>, window_params = [{transform_indices = @transform_0, window_bounds = array<i64: 8, 128>}, {transform_indices = @transform_1, window_bounds = array<i64: 128, 128>}, {transform_indices = @transform_2, window_bounds = array<i64: 128, 128>}, {pipeline_mode = #tpu.pipeline_mode<synchronous>, transform_indices = @transform_3, window_bounds = array<i64: 1, 128>}, {transform_indices = @transform_4, window_bounds = array<i64: 1, 128>}, {transform_indices = @transform_5, window_bounds = array<i64: 1, 128>}, {transform_indices = @transform_6, window_bounds = array<i64: 8, 128>}]} {
    %c0 = arith.constant 0 : index
    %c0_0 = arith.constant 0 : index
    %0 = vector.load %arg2[%c0, %c0_0] : memref<8x128xf32, #tpu.memory_space<vmem>>, vector<8x128xf32>
    %c0_1 = arith.constant 0 : index
    %c0_2 = arith.constant 0 : index
    %1 = vector.load %arg3[%c0_1, %c0_2] : memref<128x128xf32, #tpu.memory_space<vmem>>, vector<128x128xf32>
    %cst = arith.constant dense<0.000000e+00> : vector<8x128xf32>
    %2 = tpu.matmul %0, %1, %cst {dimension_numbers = #tpu.dot_dimension_numbers<[1], [0], [0], [1], [0, 0, 1, 1], [], []>} : vector<8x128xf32>, vector<128x128xf32>, vector<8x128xf32> -> vector<8x128xf32>
    %c0_3 = arith.constant 0 : index
    %c0_4 = arith.constant 0 : index
    %3 = vector.load %arg5[%c0_3, %c0_4] : memref<1x128xf32, #tpu.memory_space<vmem>>, vector<1x128xf32>
    %4 = vector.broadcast %3 : vector<1x128xf32> to vector<8x128xf32>
    %5 = arith.mulf %0, %4 : vector<8x128xf32>
    %c0_5 = arith.constant 0 : index
    %c0_6 = arith.constant 0 : index
    %6 = vector.load %arg4[%c0_5, %c0_6] : memref<128x128xf32, #tpu.memory_space<vmem>>, vector<128x128xf32>
    %cst_7 = arith.constant dense<0.000000e+00> : vector<8x128xf32>
    %7 = tpu.matmul %5, %6, %cst_7 {dimension_numbers = #tpu.dot_dimension_numbers<[1], [0], [0], [1], [0, 0, 1, 1], [], []>} : vector<8x128xf32>, vector<128x128xf32>, vector<8x128xf32> -> vector<8x128xf32>
    %c0_8 = arith.constant 0 : index
    %c0_9 = arith.constant 0 : index
    %8 = vector.load %arg6[%c0_8, %c0_9] : memref<1x128xf32, #tpu.memory_space<vmem>>, vector<1x128xf32>
    %9 = vector.broadcast %8 : vector<1x128xf32> to vector<8x128xf32>
    %10 = arith.mulf %9, %7 : vector<8x128xf32>
    %11 = arith.addf %2, %10 : vector<8x128xf32>
    %c0_10 = arith.constant 0 : index
    %c0_11 = arith.constant 0 : index
    %12 = vector.load %arg7[%c0_10, %c0_11] : memref<1x128xf32, #tpu.memory_space<vmem>>, vector<1x128xf32>
    %13 = vector.broadcast %12 : vector<1x128xf32> to vector<8x128xf32>
    %14 = arith.addf %11, %13 : vector<8x128xf32>
    %c0_12 = arith.constant 0 : index
    %c0_13 = arith.constant 0 : index
    %15 = vector.load %arg8[%c0_12, %c0_13] : memref<8x128xf32, #tpu.memory_space<vmem>>, vector<8x128xf32>
    tpu.vector_store %arg8[%c0_12, %c0_13], %14 {strides = array<i32>} : memref<8x128xf32, #tpu.memory_space<vmem>>, vector<8x128xf32>,
    return
  }
  func.func @transform_0(%arg0: i32, %arg1: i32) -> (i32, i32) {
    %c0_i32 = arith.constant 0 : i32
    %c0_i32_0 = arith.constant 0 : i32
    return %arg0, %c0_i32 : i32, i32
  }
  func.func @transform_1(%arg0: i32, %arg1: i32) -> (i32, i32) {
    %c0_i32 = arith.constant 0 : i32
    %c0_i32_0 = arith.constant 0 : i32
    return %c0_i32, %arg1 : i32, i32
  }
  func.func @transform_2(%arg0: i32, %arg1: i32) -> (i32, i32) {
    %c0_i32 = arith.constant 0 : i32
    %c0_i32_0 = arith.constant 0 : i32
    return %c0_i32, %arg1 : i32, i32
  }
  func.func @transform_3(%arg0: i32, %arg1: i32) -> (i32, i32) {
    %c0_i32 = arith.constant 0 : i32
    %c0_i32_0 = arith.constant 0 : i32
    %c0_i32_1 = arith.constant 0 : i32
    return %c0_i32, %c0_i32_0 : i32, i32
  }
  func.func @transform_4(%arg0: i32, %arg1: i32) -> (i32, i32) {
    %c0_i32 = arith.constant 0 : i32
    %c0_i32_0 = arith.constant 0 : i32
    return %c0_i32, %arg1 : i32, i32
  }
  func.func @transform_5(%arg0: i32, %arg1: i32) -> (i32, i32) {
    %c0_i32 = arith.constant 0 : i32
    %c0_i32_0 = arith.constant 0 : i32
    return %c0_i32, %arg1 : i32, i32
  }
  func.func @transform_6(%arg0: i32, %arg1: i32) -> (i32, i32) {
    %c0_i32 = arith.constant 0 : i32
    return %arg0, %arg1 : i32, i32
  }
}

</mosaic_0001>

<llo_original>
// kernel: tpu_custom_call.1
$region0: #{tpu_custom_call.1}
  #allocation0 [shape = 'u32[]', space=smem, size = 0x4, offset = 0x4, fixed_abs, tag = 'smem constant byte address 0x4 - core index']
  #allocation1 [shape = 'u32[144,128]{1,0:T(1,128)}', space=vmem, size = 0x12000, scoped, tag = 'internal scratch']
  %s0 = inlined_call_operand.hbm [shape: f32[8,128], index: 0, kind: input, shape index: {}]
  %s1 = inlined_call_operand.hbm [shape: f32[128,128], index: 1, kind: input, shape index: {}]
  %s2 = inlined_call_operand.hbm [shape: f32[128,128], index: 2, kind: input, shape index: {}]
  %s3 = inlined_call_operand.vmem [shape: f32[1,128], index: 3, kind: input, shape index: {}]
  %s4 = inlined_call_operand.vmem [shape: f32[1,128], index: 4, kind: input, shape index: {}]
  %s5 = inlined_call_operand.vmem [shape: f32[1,128], index: 5, kind: input, shape index: {}]
  %s6 = inlined_call_operand.hbm [shape: f32[8,128], index: 6, kind: output, shape index: {}]
  %s7 = sld [smem:[#allocation0]]
  $region46: #{tpu_custom_call.1} parent=0
    _
  %s9 = ssub.s32 1, %s7
  %s10 = scalar_select 0, %s9, %s7
  $region1: #{tpu_custom_call.1} parent=0
    #allocation2 [shape = 'u8[4096]{0}', space=vmem, size = 0x1000, scoped, tag = 'input window, operand 0, single buffered']
    #allocation3 [shape = 's32[1]{0}', space=sflag, size = 0x4, scoped, tag = 'scoped memory for tpu_custom_call.1']
    #allocation4 [shape = 's32[1]{0}', space=sflag, size = 0x4, scoped, tag = 'scoped memory for tpu_custom_call.1']
    #allocation5 [shape = 'u8[65536]{0}', space=vmem, size = 0x10000, scoped, tag = 'input window, operand 1, single buffered']
    #allocation6 [shape = 's32[1]{0}', space=sflag, size = 0x4, scoped, tag = 'scoped memory for tpu_custom_call.1']
    #allocation7 [shape = 'u8[65536]{0}', space=vmem, size = 0x10000, scoped, tag = 'input window, operand 2, single buffered']
    #allocation8 [shape = 'u8[4096]{0}', space=vmem, size = 0x1000, scoped, tag = 'output window, operand 0, single buffered']
    %11 = vsyncpa [#allocation3], 0
    %12 = vsyncpa [#allocation6], 0
    %13 = vsyncpa [#allocation4], 0
    // Predicated region
    $region2: #{tpu_custom_call.1} parent=1 // pred_check
      _
    $region3: #{tpu_custom_call.1} parent=1 // pred_check_branch
      %15 = sbr.rel (0) target = $region5
    $region4: #{tpu_custom_call.1} parent=1 // pred_region
      %s17 = ssub.s32 128, 128
      %18 = vsyncadd [#allocation3], %s17
      %s20 = sshll.u32 [#allocation2], 4
      %s21 = int_to_ptr.vmem [resolvable:$true] %s20
      %23 = dma.hbm_to_vmem [thread:$0]  %s0, 128, %s21, [#allocation3]
    $region5: #{tpu_custom_call.1} parent=1 // pred_fallthru
      _
    // Predicated region
    $region6: #{tpu_custom_call.1} parent=1 // pred_check
      _
    $region7: #{tpu_custom_call.1} parent=1 // pred_check_branch
      %25 = sbr.rel (0) target = $region9
    $region8: #{tpu_custom_call.1} parent=1 // pred_region
      %s27 = ssub.s32 2048, 2048
      %28 = vsyncadd [#allocation6], %s27
      %s29 = sshll.u32 [#allocation5], 4
      %s30 = int_to_ptr.vmem [resolvable:$true] %s29
      %35 = dma.hbm_to_vmem [thread:$0]  %s1, 2048, %s30, [#allocation6], 128, 128, 8
    $region9: #{tpu_custom_call.1} parent=1 // pred_fallthru
      _
    // Predicated region
    $region10: #{tpu_custom_call.1} parent=1 // pred_check
      _
    $region11: #{tpu_custom_call.1} parent=1 // pred_check_branch
      %37 = sbr.rel (0) target = $region13
    $region12: #{tpu_custom_call.1} parent=1 // pred_region
      %s39 = ssub.s32 2048, 2048
      %40 = vsyncadd [#allocation6], %s39
      %s41 = sshll.u32 [#allocation7], 4
      %s42 = int_to_ptr.vmem [resolvable:$true] %s41
      %47 = dma.hbm_to_vmem [thread:$0]  %s2, 2048, %s42, [#allocation6], 128, 128, 8
    $region13: #{tpu_custom_call.1} parent=1 // pred_fallthru
      _
    // Predicated region
    $region14: #{tpu_custom_call.1} parent=1 // pred_check
      _
    $region15: #{tpu_custom_call.1} parent=1 // pred_check_branch
      %49 = sbr.rel (0) target = $region17
    $region16: #{tpu_custom_call.1} parent=1 // pred_region
      _
    $region17: #{tpu_custom_call.1} parent=1 // pred_fallthru
      _
    // Predicated region
    $region18: #{tpu_custom_call.1} parent=1 // pred_check
      _
    $region19: #{tpu_custom_call.1} parent=1 // pred_check_branch
      %51 = sbr.rel (0) target = $region21
    $region20: #{tpu_custom_call.1} parent=1 // pred_region
      _
    $region21: #{tpu_custom_call.1} parent=1 // pred_fallthru
      _
    // Predicated region
    $region22: #{tpu_custom_call.1} parent=1 // pred_check
      _
    $region23: #{tpu_custom_call.1} parent=1 // pred_check_branch
      %53 = sbr.rel (0) target = $region25
    $region24: #{tpu_custom_call.1} parent=1 // pred_region
      _
    $region25: #{tpu_custom_call.1} parent=1 // pred_fallthru
      _
    // Predicated region
    $region26: #{tpu_custom_call.1} parent=1 // pred_check
      _
    $region27: #{tpu_custom_call.1} parent=1 // pred_check_branch
      %55 = sbr.rel (0) target = $region29
    $region28: #{tpu_custom_call.1} parent=1 // pred_region
      %56 = dma.done [#allocation3], 128
    $region29: #{tpu_custom_call.1} parent=1 // pred_fallthru
      _
    // Predicated region
    $region30: #{tpu_custom_call.1} parent=1 // pred_check
      _
    $region31: #{tpu_custom_call.1} parent=1 // pred_check_branch
      %58 = sbr.rel (0) target = $region33
    $region32: #{tpu_custom_call.1} parent=1 // pred_region
      %59 = dma.done [#allocation6], 2048
    $region33: #{tpu_custom_call.1} parent=1 // pred_fallthru
      _
    // Predicated region
    $region34: #{tpu_custom_call.1} parent=1 // pred_check
      _
    $region35: #{tpu_custom_call.1} parent=1 // pred_check_branch
      %61 = sbr.rel (0) target = $region37
    $region36: #{tpu_custom_call.1} parent=1 // pred_region
      %62 = dma.done [#allocation6], 2048
    $region37: #{tpu_custom_call.1} parent=1 // pred_fallthru
      _
    %v63 = vld [vmem:[#allocation2] sm:$0xff]
    %v64 = vld [vmem:[#allocation5] sm:$0xff]
    %v65 = vld [vmem:[#allocation5 + $0x8] sm:$0xff]
    %v66 = vld [vmem:[#allocation5 + $0x10] sm:$0xff]
    %v67 = vld [vmem:[#allocation5 + $0x18] sm:$0xff]
    %v68 = vld [vmem:[#allocation5 + $0x20] sm:$0xff]
    %v69 = vld [vmem:[#allocation5 + $0x28] sm:$0xff]
    %v70 = vld [vmem:[#allocation5 + $0x30] sm:$0xff]
    %v71 = vld [vmem:[#allocation5 + $0x38] sm:$0xff]
    %v72 = vld [vmem:[#allocation5 + $0x40] sm:$0xff]
    %v73 = vld [vmem:[#allocation5 + $0x48] sm:$0xff]
    %v74 = vld [vmem:[#allocation5 + $0x50] sm:$0xff]
    %v75 = vld [vmem:[#allocation5 + $0x58] sm:$0xff]
    %v76 = vld [vmem:[#allocation5 + $0x60] sm:$0xff]
    %v77 = vld [vmem:[#allocation5 + $0x68] sm:$0xff]
    %v78 = vld [vmem:[#allocation5 + $0x70] sm:$0xff]
    %v79 = vld [vmem:[#allocation5 + $0x78] sm:$0xff]
    %v80 = vld [vmem:[%s3] sm:$0x1]
    %v82 = vlaneseq
    %v83 = vshrl.u32 %v82, 7
    %v84 = vsub.s32 0, %v83
    %v85 = vrot.slane %v80, %v84
    %v87 = vmul.f32 %v63, %v85
    %v88 = vld [vmem:[#allocation7] sm:$0xff]
    %v89 = vld [vmem:[#allocation7 + $0x8] sm:$0xff]
    %v90 = vld [vmem:[#allocation7 + $0x10] sm:$0xff]
    %v91 = vld [vmem:[#allocation7 + $0x18] sm:$0xff]
    %v92 = vld [vmem:[#allocation7 + $0x20] sm:$0xff]
    %v93 = vld [vmem:[#allocation7 + $0x28] sm:$0xff]
    %v94 = vld [vmem:[#allocation7 + $0x30] sm:$0xff]
    %v95 = vld [vmem:[#allocation7 + $0x38] sm:$0xff]
    %v96 = vld [vmem:[#allocation7 + $0x40] sm:$0xff]
    %v97 = vld [vmem:[#allocation7 + $0x48] sm:$0xff]
    %v98 = vld [vmem:[#allocation7 + $0x50] sm:$0xff]
    %v99 = vld [vmem:[#allocation7 + $0x58] sm:$0xff]
    %v100 = vld [vmem:[#allocation7 + $0x60] sm:$0xff]
    %v101 = vld [vmem:[#allocation7 + $0x68] sm:$0xff]
    %v102 = vld [vmem:[#allocation7 + $0x70] sm:$0xff]
    %v103 = vld [vmem:[#allocation7 + $0x78] sm:$0xff]
    %104 = vmatprep.subr.mxu0 0.0
    %105 = vmatpush1.msra.mxu0 %v88
    %106 = vmatprep.subr.mxu0 0.0
    %107 = vmatpush1.msra.mxu0 %v89
    %108 = vmatprep.subr.mxu0 0.0
    %109 = vmatpush1.msra.mxu0 %v90
    %110 = vmatprep.subr.mxu0 0.0
    %111 = vmatpush1.msra.mxu0 %v91
    %112 = vmatprep.subr.mxu0 0.0
    %113 = vmatpush1.msra.mxu0 %v92
    %114 = vmatprep.subr.mxu0 0.0
    %115 = vmatpush1.msra.mxu0 %v93
    %116 = vmatprep.subr.mxu0 0.0
    %117 = vmatpush1.msra.mxu0 %v94
    %118 = vmatprep.subr.mxu0 0.0
    %119 = vmatpush1.msra.mxu0 %v95
    %120 = vmatprep.subr.mxu0 0.0
    %121 = vmatpush1.msra.mxu0 %v96
    %122 = vmatprep.subr.mxu0 0.0
    %123 = vmatpush1.msra.mxu0 %v97
    %124 = vmatprep.subr.mxu0 0.0
    %125 = vmatpush1.msra.mxu0 %v98
    %126 = vmatprep.subr.mxu0 0.0
    %127 = vmatpush1.msra.mxu0 %v99
    %128 = vmatprep.subr.mxu0 0.0
    %129 = vmatpush1.msra.mxu0 %v100
    %130 = vmatprep.subr.mxu0 0.0
    %131 = vmatpush1.msra.mxu0 %v101
    %132 = vmatprep.subr.mxu0 0.0
    %133 = vmatpush1.msra.mxu0 %v102
    %134 = vmatprep.subr.mxu0 0.0
    %135 = vmatpush1.msra.mxu0 %v103
    %136 = vmatprep.subr.mxu0 0.0
    %137 = vmatpush1.msra.mxu0 0.0
    %138 = vmatprep.subr.mxu0 0.0
    %139 = vmatpush1.msra.mxu0 0.0
    %140 = vmatprep.subr.mxu0 0.0
    %141 = vmatpush1.msra.mxu0 0.0
    %142 = vmatprep.subr.mxu0 0.0
    %143 = vmatpush1.msra.mxu0 0.0
    %144 = vmatprep.subr.mxu0 0.0
    %145 = vmatpush1.msra.mxu0 0.0
    %146 = vmatprep.subr.mxu0 0.0
    %147 = vmatpush1.msra.mxu0 0.0
    %148 = vmatprep.subr.mxu0 0.0
    %149 = vmatpush1.msra.mxu0 0.0
    %150 = vmatprep.subr.mxu0 0.0
    %151 = vmatpush1.msra.mxu0 0.0
    %152 = vmatprep.subr.mxu0 0.0
    %153 = vmatpush1.msra.mxu0 0.0
    %154 = vmatprep.subr.mxu0 0.0
    %155 = vmatpush1.msra.mxu0 0.0
    %156 = vmatprep.subr.mxu0 0.0
    %157 = vmatpush1.msra.mxu0 0.0
    %158 = vmatprep.subr.mxu0 0.0
    %159 = vmatpush1.msra.mxu0 0.0
    %160 = vmatprep.subr.mxu0 0.0
    %161 = vmatpush1.msra.mxu0 0.0
    %162 = vmatprep.subr.mxu0 0.0
    %163 = vmatpush1.msra.mxu0 0.0
    %164 = vmatprep.subr.mxu0 0.0
    %165 = vmatpush1.msra.mxu0 0.0
    %166 = vmatprep.subr.mxu0 0.0
    %167 = vmatpush1.msra.mxu0 0.0
    %168 = vmatprep.mubr.f32.mxu0 0.0
    %169 = vmatmul.mubr.f32.gmra.mrb[0].mxu0 %v87
    %v170 = vpop.f32.mrb[0].mxu0
    %v171 = vadd.f32 0.0, %v170
    %v172 = vpop.f32.mrb[0].mxu0
    %173 = vdwg.mxu0
    %v174 = vld [vmem:[%s4] sm:$0x1]
    %v176 = vlaneseq
    %v177 = vshrl.u32 %v176, 7
    %v178 = vsub.s32 0, %v177
    %v179 = vrot.slane %v174, %v178
    %v181 = vmul.f32 %v179, %v171
    %182 = vmatprep.subr.mxu0 0.0
    %183 = vmatpush1.msra.mxu0 %v64
    %184 = vmatprep.subr.mxu0 0.0
    %185 = vmatpush1.msra.mxu0 %v65
    %186 = vmatprep.subr.mxu0 0.0
    %187 = vmatpush1.msra.mxu0 %v66
    %188 = vmatprep.subr.mxu0 0.0
    %189 = vmatpush1.msra.mxu0 %v67
    %190 = vmatprep.subr.mxu0 0.0
    %191 = vmatpush1.msra.mxu0 %v68
    %192 = vmatprep.subr.mxu0 0.0
    %193 = vmatpush1.msra.mxu0 %v69
    %194 = vmatprep.subr.mxu0 0.0
    %195 = vmatpush1.msra.mxu0 %v70
    %196 = vmatprep.subr.mxu0 0.0
    %197 = vmatpush1.msra.mxu0 %v71
    %198 = vmatprep.subr.mxu0 0.0
    %199 = vmatpush1.msra.mxu0 %v72
    %200 = vmatprep.subr.mxu0 0.0
    %201 = vmatpush1.msra.mxu0 %v73
    %202 = vmatprep.subr.mxu0 0.0
    %203 = vmatpush1.msra.mxu0 %v74
    %204 = vmatprep.subr.mxu0 0.0
    %205 = vmatpush1.msra.mxu0 %v75
    %206 = vmatprep.subr.mxu0 0.0
    %207 = vmatpush1.msra.mxu0 %v76
    %208 = vmatprep.subr.mxu0 0.0
    %209 = vmatpush1.msra.mxu0 %v77
    %210 = vmatprep.subr.mxu0 0.0
    %211 = vmatpush1.msra.mxu0 %v78
    %212 = vmatprep.subr.mxu0 0.0
    %213 = vmatpush1.msra.mxu0 %v79
    %214 = vmatprep.subr.mxu0 0.0
    %215 = vmatpush1.msra.mxu0 0.0
    %216 = vmatprep.subr.mxu0 0.0
    %217 = vmatpush1.msra.mxu0 0.0
    %218 = vmatprep.subr.mxu0 0.0
    %219 = vmatpush1.msra.mxu0 0.0
    %220 = vmatprep.subr.mxu0 0.0
    %221 = vmatpush1.msra.mxu0 0.0
    %222 = vmatprep.subr.mxu0 0.0
    %223 = vmatpush1.msra.mxu0 0.0
    %224 = vmatprep.subr.mxu0 0.0
    %225 = vmatpush1.msra.mxu0 0.0
    %226 = vmatprep.subr.mxu0 0.0
    %227 = vmatpush1.msra.mxu0 0.0
    %228 = vmatprep.subr.mxu0 0.0
    %229 = vmatpush1.msra.mxu0 0.0
    %230 = vmatprep.subr.mxu0 0.0
    %231 = vmatpush1.msra.mxu0 0.0
    %232 = vmatprep.subr.mxu0 0.0
    %233 = vmatpush1.msra.mxu0 0.0
    %234 = vmatprep.subr.mxu0 0.0
    %235 = vmatpush1.msra.mxu0 0.0
    %236 = vmatprep.subr.mxu0 0.0
    %237 = vmatpush1.msra.mxu0 0.0
    %238 = vmatprep.subr.mxu0 0.0
    %239 = vmatpush1.msra.mxu0 0.0
    %240 = vmatprep.subr.mxu0 0.0
    %241 = vmatpush1.msra.mxu0 0.0
    %242 = vmatprep.subr.mxu0 0.0
    %243 = vmatpush1.msra.mxu0 0.0
    %244 = vmatprep.subr.mxu0 0.0
    %245 = vmatpush1.msra.mxu0 0.0
    %246 = vmatprep.mubr.f32.mxu0 0.0
    %247 = vmatmul.mubr.f32.gmra.mrb[0].mxu0 %v63
    %v248 = vpop.f32.mrb[0].mxu0
    %v249 = vadd.f32 %v181, %v248
    %v250 = vpop.f32.mrb[0].mxu0
    %251 = vdwg.mxu0
    %v252 = vld [vmem:[%s5] sm:$0x1]
    %v254 = vlaneseq
    %v255 = vshrl.u32 %v254, 7
    %v256 = vsub.s32 0, %v255
    %v257 = vrot.slane %v252, %v256
    %v259 = vadd.f32 %v249, %v257
    %260 = vst [vmem:[#allocation8] sm:$0xff] %v259
    // Predicated region
    $region38: #{tpu_custom_call.1} parent=1 // pred_check
      _
    $region39: #{tpu_custom_call.1} parent=1 // pred_check_branch
      %262 = sbr.rel (0) target = $region41
    $region40: #{tpu_custom_call.1} parent=1 // pred_region
      %s264 = ssub.s32 128, 128
      %265 = vsyncadd [#allocation4], %s264
      %s267 = sshll.u32 [#allocation8], 4
      %s268 = int_to_ptr.vmem [resolvable:$true] %s267
      %270 = dma.vmem_to_hbm [thread:$0]  %s268, 128, %s6, [#allocation4]
    $region41: #{tpu_custom_call.1} parent=1 // pred_fallthru
      _
    // Predicated region
    $region42: #{tpu_custom_call.1} parent=1 // pred_check
      _
    $region43: #{tpu_custom_call.1} parent=1 // pred_check_branch
      %272 = sbr.rel (0) target = $region45
    $region44: #{tpu_custom_call.1} parent=1 // pred_region
      %273 = dma.done [#allocation4], 128
    $region45: #{tpu_custom_call.1} parent=1 // pred_fallthru
      _
    %274 = vsyncpa [#allocation3], 1
    %275 = vsyncpa [#allocation6], 1
    %276 = vsyncpa [#allocation4], 1

</llo_original>
